<compile_context>
chip_gen: v5e
topology: v5e:2x2
jax: 0.10.0
libtpu: 0.0.40
codegen_flags: <defaults>
</compile_context>

<pallas_src>
import jax
import jax.numpy as jnp
from jax.experimental import pallas as pl
from jax.experimental.pallas import tpu as pltpu


def _cattention_kernel(x_ref, y_ref, wx_ref, wy_ref, b_ref, wl1_ref,
                       wl2g_ref, o_ref):
    # x_ref / y_ref / o_ref: (1, C, HW)   one sample per grid step
    # wx_ref / wy_ref:       (C, C)       split ConvTranspose2d(2C, C, 1) weight
    # b_ref:                 (C, 1)       conv bias
    # wl1_ref:               (C, Ch)      linear1 weight  (t[j] = sum_c W[c,j]*pooled[c])
    # wl2g_ref:              (C, Ch)      gamma * linear2 weight^T
    x = x_ref[0]                                               # (C, HW)
    y = y_ref[0]                                               # (C, HW)

    # --- channel-attention (squeeze-excite) branch: pure VPU/XLU ------------
    # AdaptiveAvgPool2d(1) == mean over the HW lanes.
    pooled = jnp.mean(y, axis=1, keepdims=True)                # (C, 1)
    t = jnp.sum(wl1_ref[...] * pooled, axis=0, keepdims=True)  # (1, Ch)
    h = jnp.maximum(t, 0.0)                                    # ReLU
    # TODO(synk): nn.Dropout(p=0.5) is identity in eval mode; a training-mode
    # stochastic mask (pltpu.prng_seed + prng_random_bits) is not implemented.
    ww = jnp.sum(wl2g_ref[...] * h, axis=1, keepdims=True)     # (C, 1), gamma folded in

    # --- conv1(cat(x, y)) as two accumulated f32 MXU dots (no concat) -------
    conv = (jnp.dot(wx_ref[...], x, preferred_element_type=jnp.float32)
            + jnp.dot(wy_ref[...], y, preferred_element_type=jnp.float32)
            + b_ref[...])                                      # (C, HW)

    # out = x + gamma * (conv * ww_orig) * x  ==  x * (1 + conv * ww)
    o_ref[0] = (x * (1.0 + conv * ww)).astype(o_ref.dtype)


def cattention(x_nchw, y_nchw, Wcat, bcat, Wl1, Wl2, gamma):
    N, C, H, W = x_nchw.shape
    HW = H * W
    Ch = Wl1.shape[1]

    # NCHW -> (N, C, HW): a pure reshape, no transpose.
    # TODO(synk): real SiamBAN maps (25x25, 31x31) are not lane multiples of
    # 128; blocks stay legal (block == full array) but stores become masked —
    # a lane-padding strategy would be needed at those sizes.
    x = x_nchw.reshape(N, C, HW)
    y = y_nchw.reshape(N, C, HW)

    # ConvTranspose2d(2C, C, 1): out[o] = sum_i Wcat[i, o] * cat[i] + b[o].
    # Split along the input-channel axis so the kernel never concatenates.
    Wx = Wcat[:C, :].T                      # (C, C)  acts on x
    Wy = Wcat[C:, :].T                      # (C, C)  acts on y
    b = bcat.reshape(C, 1)
    wl1 = Wl1                               # (C, Ch)
    wl2g = (gamma * Wl2).T                  # (C, Ch)  gamma folded into linear2

    out = pl.pallas_call(
        _cattention_kernel,
        out_shape=jax.ShapeDtypeStruct((N, C, HW), x.dtype),
        grid_spec=pltpu.PrefetchScalarGridSpec(
            num_scalar_prefetch=0,
            grid=(N,),                                          # one sample / step
            in_specs=[
                pl.BlockSpec((1, C, HW), lambda n: (n, 0, 0)),  # x
                pl.BlockSpec((1, C, HW), lambda n: (n, 0, 0)),  # y
                pl.BlockSpec((C, C), lambda n: (0, 0)),         # Wx
                pl.BlockSpec((C, C), lambda n: (0, 0)),         # Wy
                pl.BlockSpec((C, 1), lambda n: (0, 0)),         # bias
                pl.BlockSpec((C, Ch), lambda n: (0, 0)),        # linear1 weight
                pl.BlockSpec((C, Ch), lambda n: (0, 0)),        # gamma * linear2^T
            ],
            out_specs=pl.BlockSpec((1, C, HW), lambda n: (n, 0, 0)),
        ),
        compiler_params=pltpu.CompilerParams(
            dimension_semantics=("parallel",)),                 # megacore on v7x
    )(x, y, Wx, Wy, b, wl1, wl2g)

    # (N, C, HW) -> NCHW: again a pure reshape.
    return out.reshape(N, C, H, W)


def cattention_reference(x, y, Wcat, bcat, Wl1, Wl2, gamma):
    """Pure-JAX reference matching the PyTorch forward (eval mode)."""
    pooled = y.mean(axis=(2, 3))                                   # (N, C)
    h = jnp.maximum(pooled @ Wl1, 0.0)                             # (N, Ch)
    ww = (h @ Wl2)[:, :, None, None]                               # (N, C, 1, 1)
    cat = jnp.concatenate([x, y], axis=1)                          # (N, 2C, H, W)
    conv = jnp.einsum('nihw,io->nohw', cat, Wcat) + bcat[None, :, None, None]
    weight = conv * ww
    return x + gamma * weight * x


if __name__ == "__main__":
    N, C, H, W = 2, 12, 16, 16          # in_dim = 12 -> hidden = in_dim // 6 = 2
    Ch = C // 6

    key = jax.random.PRNGKey(0)
    k1, k2, k3, k4, k5, k6 = jax.random.split(key, 6)

    x = jax.random.normal(k1, (N, C, H, W), jnp.float32)
    y = jax.random.normal(k2, (N, C, H, W), jnp.float32)

    # Deterministic synthetic parameters (shapes from Cattention.__init__):
    Wcat = jax.random.normal(k3, (2 * C, C), jnp.float32) * 0.1  # ConvT(2C,C,1) weight[:, :, 0, 0]
    bcat = jax.random.normal(k4, (C,), jnp.float32) * 0.1        # ConvT bias
    Wl1 = jax.random.normal(k5, (C, Ch), jnp.float32) * 0.1      # Conv2d(C, C//6, 1) weight^T
    Wl2 = jax.random.normal(k6, (Ch, C), jnp.float32) * 0.1      # Conv2d(C//6, C, 1) weight^T
    # PyTorch initializes gamma to zeros(1) (output would equal x); use a
    # nonzero value so the full compute path is exercised.
    gamma = jnp.float32(0.5)

    out = cattention(x, y, Wcat, bcat, Wl1, Wl2, gamma)
    out = jax.block_until_ready(out)

    ref = cattention_reference(x, y, Wcat, bcat, Wl1, Wl2, gamma)
    assert out.shape == ref.shape == (N, C, H, W)
    # Everything is f32 now (f32 MXU operands, f32 accumulate) -> tight tolerance.
    assert jnp.allclose(out, ref, rtol=1e-5, atol=1e-5), (
        f"max abs err {jnp.max(jnp.abs(out - ref))}")

    print("KERNEL_OK")
</pallas_src>

<mosaic_0001>
module attributes {stable_mosaic.version = 11 : i64} {
  func.func @_cattention_kernel(%arg0: i32, %arg1: memref<1x12x256xf32, #tpu.memory_space<vmem>>, %arg2: memref<1x12x256xf32, #tpu.memory_space<vmem>>, %arg3: memref<12x12xf32, #tpu.memory_space<vmem>>, %arg4: memref<12x12xf32, #tpu.memory_space<vmem>>, %arg5: memref<12x1xf32, #tpu.memory_space<vmem>>, %arg6: memref<12x2xf32, #tpu.memory_space<vmem>>, %arg7: memref<12x2xf32, #tpu.memory_space<vmem>>, %arg8: memref<1x12x256xf32, #tpu.memory_space<vmem>>) attributes {dimension_semantics = [#tpu.dimension_semantics<parallel>], iteration_bounds = array<i64: 2>, scalar_prefetch = 0 : i64, scratch_operands = 0 : i64, tpu.core_type = #tpu.core_type<tc>, window_params = [{transform_indices = @transform_0, window_bounds = array<i64: 1, 12, 256>}, {transform_indices = @transform_1, window_bounds = array<i64: 1, 12, 256>}, {pipeline_mode = #tpu.pipeline_mode<synchronous>, transform_indices = @transform_2, window_bounds = array<i64: 12, 12>}, {pipeline_mode = #tpu.pipeline_mode<synchronous>, transform_indices = @transform_3, window_bounds = array<i64: 12, 12>}, {pipeline_mode = #tpu.pipeline_mode<synchronous>, transform_indices = @transform_4, window_bounds = array<i64: 12, 1>}, {pipeline_mode = #tpu.pipeline_mode<synchronous>, transform_indices = @transform_5, window_bounds = array<i64: 12, 2>}, {pipeline_mode = #tpu.pipeline_mode<synchronous>, transform_indices = @transform_6, window_bounds = array<i64: 12, 2>}, {transform_indices = @transform_7, window_bounds = array<i64: 1, 12, 256>}]} {
    %c0 = arith.constant 0 : index
    %c0_0 = arith.constant 0 : index
    %c0_1 = arith.constant 0 : index
    %0 = vector.load %arg1[%c0, %c0_0, %c0_1] : memref<1x12x256xf32, #tpu.memory_space<vmem>>, vector<1x12x256xf32>
    %1 = vector.shape_cast %0 : vector<1x12x256xf32> to vector<12x256xf32>
    %c0_2 = arith.constant 0 : index
    %c0_3 = arith.constant 0 : index
    %c0_4 = arith.constant 0 : index
    %2 = vector.load %arg2[%c0_2, %c0_3, %c0_4] : memref<1x12x256xf32, #tpu.memory_space<vmem>>, vector<1x12x256xf32>
    %3 = vector.shape_cast %2 : vector<1x12x256xf32> to vector<12x256xf32>
    %cst = arith.constant dense<0.000000e+00> : vector<12xf32>
    %4 = vector.multi_reduction <add>, %3, %cst [1] : vector<12x256xf32> to vector<12xf32>
    %5 = vector.shape_cast %4 : vector<12xf32> to vector<12x1xf32>
    %cst_5 = arith.constant 2.560000e+02 : f32
    %6 = vector.broadcast %cst_5 : f32 to vector<12x1xf32>
    %7 = arith.divf %5, %6 : vector<12x1xf32>
    %c0_6 = arith.constant 0 : index
    %c0_7 = arith.constant 0 : index
    %8 = vector.load %arg6[%c0_6, %c0_7] : memref<12x2xf32, #tpu.memory_space<vmem>>, vector<12x2xf32>
    %9 = vector.broadcast %7 : vector<12x1xf32> to vector<12x2xf32>
    %10 = arith.mulf %8, %9 : vector<12x2xf32>
    %cst_8 = arith.constant dense<0.000000e+00> : vector<2xf32>
    %11 = vector.multi_reduction <add>, %10, %cst_8 [0] : vector<12x2xf32> to vector<2xf32>
    %12 = vector.shape_cast %11 : vector<2xf32> to vector<1x2xf32>
    %cst_9 = arith.constant 0.000000e+00 : f32
    %13 = vector.broadcast %cst_9 : f32 to vector<1x2xf32>
    %14 = arith.maximumf %12, %13 : vector<1x2xf32>
    %c0_10 = arith.constant 0 : index
    %c0_11 = arith.constant 0 : index
    %15 = vector.load %arg7[%c0_10, %c0_11] : memref<12x2xf32, #tpu.memory_space<vmem>>, vector<12x2xf32>
    %16 = vector.broadcast %14 : vector<1x2xf32> to vector<12x2xf32>
    %17 = arith.mulf %15, %16 : vector<12x2xf32>
    %cst_12 = arith.constant dense<0.000000e+00> : vector<12xf32>
    %18 = vector.multi_reduction <add>, %17, %cst_12 [1] : vector<12x2xf32> to vector<12xf32>
    %19 = vector.shape_cast %18 : vector<12xf32> to vector<12x1xf32>
    %c0_13 = arith.constant 0 : index
    %c0_14 = arith.constant 0 : index
    %20 = vector.load %arg3[%c0_13, %c0_14] : memref<12x12xf32, #tpu.memory_space<vmem>>, vector<12x12xf32>
    %cst_15 = arith.constant dense<0.000000e+00> : vector<12x256xf32>
    %21 = tpu.matmul %20, %1, %cst_15 {dimension_numbers = #tpu.dot_dimension_numbers<[1], [0], [0], [1], [0, 0, 1, 1], [], []>} : vector<12x12xf32>, vector<12x256xf32>, vector<12x256xf32> -> vector<12x256xf32>
    %c0_16 = arith.constant 0 : index
    %c0_17 = arith.constant 0 : index
    %22 = vector.load %arg4[%c0_16, %c0_17] : memref<12x12xf32, #tpu.memory_space<vmem>>, vector<12x12xf32>
    %cst_18 = arith.constant dense<0.000000e+00> : vector<12x256xf32>
    %23 = tpu.matmul %22, %3, %cst_18 {dimension_numbers = #tpu.dot_dimension_numbers<[1], [0], [0], [1], [0, 0, 1, 1], [], []>} : vector<12x12xf32>, vector<12x256xf32>, vector<12x256xf32> -> vector<12x256xf32>
    %24 = arith.addf %21, %23 : vector<12x256xf32>
    %c0_19 = arith.constant 0 : index
    %c0_20 = arith.constant 0 : index
    %25 = vector.load %arg5[%c0_19, %c0_20] : memref<12x1xf32, #tpu.memory_space<vmem>>, vector<12x1xf32>
    %26 = vector.broadcast %25 : vector<12x1xf32> to vector<12x256xf32>
    %27 = arith.addf %24, %26 : vector<12x256xf32>
    %28 = vector.broadcast %19 : vector<12x1xf32> to vector<12x256xf32>
    %29 = arith.mulf %27, %28 : vector<12x256xf32>
    %cst_21 = arith.constant 1.000000e+00 : f32
    %30 = vector.broadcast %cst_21 : f32 to vector<12x256xf32>
    %31 = arith.addf %30, %29 : vector<12x256xf32>
    %32 = arith.mulf %1, %31 : vector<12x256xf32>
    %c0_22 = arith.constant 0 : index
    %c0_23 = arith.constant 0 : index
    %c0_24 = arith.constant 0 : index
    %33 = vector.load %arg8[%c0_22, %c0_23, %c0_24] : memref<1x12x256xf32, #tpu.memory_space<vmem>>, vector<1x12x256xf32>
    %34 = vector.shape_cast %33 : vector<1x12x256xf32> to vector<12x256xf32>
    %35 = vector.shape_cast %32 : vector<12x256xf32> to vector<1x12x256xf32>
    tpu.vector_store %arg8[%c0_22, %c0_23, %c0_24], %35 {strides = array<i32>} : memref<1x12x256xf32, #tpu.memory_space<vmem>>, vector<1x12x256xf32>,
    return
  }
  func.func @transform_0(%arg0: i32) -> (i32, i32, i32) {
    %c0_i32 = arith.constant 0 : i32
    %c0_i32_0 = arith.constant 0 : i32
    %c0_i32_1 = arith.constant 0 : i32
    return %arg0, %c0_i32, %c0_i32_0 : i32, i32, i32
  }
  func.func @transform_1(%arg0: i32) -> (i32, i32, i32) {
    %c0_i32 = arith.constant 0 : i32
    %c0_i32_0 = arith.constant 0 : i32
    %c0_i32_1 = arith.constant 0 : i32
    return %arg0, %c0_i32, %c0_i32_0 : i32, i32, i32
  }
  func.func @transform_2(%arg0: i32) -> (i32, i32) {
    %c0_i32 = arith.constant 0 : i32
    %c0_i32_0 = arith.constant 0 : i32
    %c0_i32_1 = arith.constant 0 : i32
    return %c0_i32, %c0_i32_0 : i32, i32
  }
  func.func @transform_3(%arg0: i32) -> (i32, i32) {
    %c0_i32 = arith.constant 0 : i32
    %c0_i32_0 = arith.constant 0 : i32
    %c0_i32_1 = arith.constant 0 : i32
    return %c0_i32, %c0_i32_0 : i32, i32
  }
  func.func @transform_4(%arg0: i32) -> (i32, i32) {
    %c0_i32 = arith.constant 0 : i32
    %c0_i32_0 = arith.constant 0 : i32
    %c0_i32_1 = arith.constant 0 : i32
    return %c0_i32, %c0_i32_0 : i32, i32
  }
  func.func @transform_5(%arg0: i32) -> (i32, i32) {
    %c0_i32 = arith.constant 0 : i32
    %c0_i32_0 = arith.constant 0 : i32
    %c0_i32_1 = arith.constant 0 : i32
    return %c0_i32, %c0_i32_0 : i32, i32
  }
  func.func @transform_6(%arg0: i32) -> (i32, i32) {
    %c0_i32 = arith.constant 0 : i32
    %c0_i32_0 = arith.constant 0 : i32
    %c0_i32_1 = arith.constant 0 : i32
    return %c0_i32, %c0_i32_0 : i32, i32
  }
  func.func @transform_7(%arg0: i32) -> (i32, i32, i32) {
    %c0_i32 = arith.constant 0 : i32
    %c0_i32_0 = arith.constant 0 : i32
    %c0_i32_1 = arith.constant 0 : i32
    return %arg0, %c0_i32, %c0_i32_0 : i32, i32, i32
  }
}

</mosaic_0001>

<llo_original>
// kernel: tpu_custom_call.1
$region0: #{tpu_custom_call.1}
  #allocation0 [shape = 'u32[]', space=smem, size = 0x4, offset = 0x4, fixed_abs, tag = 'smem constant byte address 0x4 - core index']
  #allocation1 [shape = 'u32[72,128]{1,0:T(1,128)}', space=vmem, size = 0x9000, scoped, tag = 'internal scratch']
  %s0 = inlined_call_operand.vmem [shape: f32[2,12,256], index: 0, kind: input, shape index: {}]
  %s1 = inlined_call_operand.vmem [shape: f32[2,12,256], index: 1, kind: input, shape index: {}]
  %s2 = inlined_call_operand.vmem [shape: f32[12,12], index: 2, kind: input, shape index: {}]
  %s3 = inlined_call_operand.vmem [shape: f32[12,12], index: 3, kind: input, shape index: {}]
  %s4 = inlined_call_operand.vmem [shape: f32[12,1], index: 4, kind: input, shape index: {}]
  %s5 = inlined_call_operand.vmem [shape: f32[12,2], index: 5, kind: input, shape index: {}]
  %s6 = inlined_call_operand.vmem [shape: f32[12,2], index: 6, kind: input, shape index: {}]
  %s7 = inlined_call_operand.vmem [shape: f32[2,12,256], index: 7, kind: output, shape index: {}]
  %s8 = sld [smem:[#allocation0]]
  $region61: #{tpu_custom_call.1} parent=0
    _
  %s10 = ssub.s32 1, %s8
  %s11 = scalar_select 0, %s10, %s8
  loop: start=0, step=1, limit=4
  $region2: #{tpu_custom_call.1} parent=0 // loop_pre_header
    _
  $region3: #{tpu_custom_call.1} parent=0 // loop_header
    %s13 = sphi 0, %s17
    %p14 = scmp.ge.s32.totalorder %s13, 4
    %s23 = sphi 0, %s25
    %s26 = sphi 0, %s23
    %s27 = sphi 0, %s26
    %s43 = sphi 0, %s27
    %s49 = sphi 0, %s51
    %s52 = sphi 0, %s49
    %s53 = sphi 0, %s52
    %s69 = sphi 0, %s53
    %s73 = sphi 0, %s73
    %s75 = sphi 0, %s73
    %s76 = sphi 0, %s75
    %s90 = sphi 0, %s76
    %s94 = sphi 0, %s94
    %s96 = sphi 0, %s94
    %s97 = sphi 0, %s96
    %s111 = sphi 0, %s97
    %s115 = sphi 0, %s115
    %s117 = sphi 0, %s115
    %s118 = sphi 0, %s117
    %s132 = sphi 0, %s118
    %s136 = sphi 0, %s136
    %s138 = sphi 0, %s136
    %s139 = sphi 0, %s138
    %s153 = sphi 0, %s139
    %s157 = sphi 0, %s157
    %s159 = sphi 0, %s157
    %s160 = sphi 0, %s159
    %s174 = sphi 0, %s160
    %s180 = sphi 0, %s182
    %s183 = sphi 0, %s180
    %s184 = sphi 0, %s183
    %s200 = sphi 0, %s184
  $region4: #{tpu_custom_call.1} parent=0 // loop_header_branch
    %16 = sbr.rel (%p14) target = $region8
  $region5: #{tpu_custom_call.1} parent=0 // loop_body
    %s18 = ssub.s32 %s13, 1
    %s19 = ssub.s32 %s13, 2
    %s20 = sadd.s32 %s13, 1
    %s21 = ssub.s32 %s13, %s20
    %p22 = scmp.eq.s32.totalorder %s21, 0
    %s24 = sadd.s32 %s23, 1
    %s25 = scalar_select %p22, %s23, %s24
    %p28 = pneg %p22
    %p29 = scmp.eq.s32.totalorder %s13, 1
    %p30 = por %p28, %p29
    %p31 = scmp.ne.s32.totalorder %s23, %s26
    %p32 = scmp.eq.s32.totalorder %s13, 0
    %p33 = por %p31, %p32
    %p34 = scmp.ne.s32.totalorder %s23, %s26
    %p35 = scmp.eq.s32.totalorder %s18, 1
    %p36 = por %p34, %p35
    %p37 = scmp.ne.s32.totalorder %s26, %s27
    %p38 = scmp.eq.s32.totalorder %s18, 0
    %p39 = por %p37, %p38
    %p40 = scmp.ne.s32.totalorder %s26, %s27
    %p41 = scmp.eq.s32.totalorder %s19, 1
    %p42 = por %p40, %p41
    %p44 = scmp.ne.s32.totalorder %s27, %s43
    %p45 = scmp.eq.s32.totalorder %s19, 0
    %p46 = por %p44, %p45
    %s47 = ssub.s32 %s13, %s20
    %p48 = scmp.eq.s32.totalorder %s47, 0
    %s50 = sadd.s32 %s49, 1
    %s51 = scalar_select %p48, %s49, %s50
    %p54 = pneg %p48
    %p55 = scmp.eq.s32.totalorder %s13, 1
    %p56 = por %p54, %p55
    %p57 = scmp.ne.s32.totalorder %s49, %s52
    %p58 = scmp.eq.s32.totalorder %s13, 0
    %p59 = por %p57, %p58
    %p60 = scmp.ne.s32.totalorder %s49, %s52
    %p61 = scmp.eq.s32.totalorder %s18, 1
    %p62 = por %p60, %p61
    %p63 = scmp.ne.s32.totalorder %s52, %s53
    %p64 = scmp.eq.s32.totalorder %s18, 0
    %p65 = por %p63, %p64
    %p66 = scmp.ne.s32.totalorder %s52, %s53
    %p67 = scmp.eq.s32.totalorder %s19, 1
    %p68 = por %p66, %p67
    %p70 = scmp.ne.s32.totalorder %s53, %s69
    %p71 = scmp.eq.s32.totalorder %s19, 0
    %p72 = por %p70, %p71
    %s74 = sadd.s32 %s73, 1
    %p77 = scmp.eq.s32.totalorder %s13, 1
    %p78 = scmp.ne.s32.totalorder %s73, %s75
    %p79 = scmp.eq.s32.totalorder %s13, 0
    %p80 = por %p78, %p79
    %p81 = scmp.ne.s32.totalorder %s73, %s75
    %p82 = scmp.eq.s32.totalorder %s18, 1
    %p83 = por %p81, %p82
    %p84 = scmp.ne.s32.totalorder %s75, %s76
    %p85 = scmp.eq.s32.totalorder %s18, 0
    %p86 = por %p84, %p85
    %p87 = scmp.ne.s32.totalorder %s75, %s76
    %p88 = scmp.eq.s32.totalorder %s19, 1
    %p89 = por %p87, %p88
    %p91 = scmp.ne.s32.totalorder %s76, %s90
    %p92 = scmp.eq.s32.totalorder %s19, 0
    %p93 = por %p91, %p92
    %s95 = sadd.s32 %s94, 1
    %p98 = scmp.eq.s32.totalorder %s13, 1
    %p99 = scmp.ne.s32.totalorder %s94, %s96
    %p100 = scmp.eq.s32.totalorder %s13, 0
    %p101 = por %p99, %p100
    %p102 = scmp.ne.s32.totalorder %s94, %s96
    %p103 = scmp.eq.s32.totalorder %s18, 1
    %p104 = por %p102, %p103
    %p105 = scmp.ne.s32.totalorder %s96, %s97
    %p106 = scmp.eq.s32.totalorder %s18, 0
    %p107 = por %p105, %p106
    %p108 = scmp.ne.s32.totalorder %s96, %s97
    %p109 = scmp.eq.s32.totalorder %s19, 1
    %p110 = por %p108, %p109
    %p112 = scmp.ne.s32.totalorder %s97, %s111
    %p113 = scmp.eq.s32.totalorder %s19, 0
    %p114 = por %p112, %p113
    %s116 = sadd.s32 %s115, 1
    %p119 = scmp.eq.s32.totalorder %s13, 1
    %p120 = scmp.ne.s32.totalorder %s115, %s117
    %p121 = scmp.eq.s32.totalorder %s13, 0
    %p122 = por %p120, %p121
    %p123 = scmp.ne.s32.totalorder %s115, %s117
    %p124 = scmp.eq.s32.totalorder %s18, 1
    %p125 = por %p123, %p124
    %p126 = scmp.ne.s32.totalorder %s117, %s118
    %p127 = scmp.eq.s32.totalorder %s18, 0
    %p128 = por %p126, %p127
    %p129 = scmp.ne.s32.totalorder %s117, %s118
    %p130 = scmp.eq.s32.totalorder %s19, 1
    %p131 = por %p129, %p130
    %p133 = scmp.ne.s32.totalorder %s118, %s132
    %p134 = scmp.eq.s32.totalorder %s19, 0
    %p135 = por %p133, %p134
    %s137 = sadd.s32 %s136, 1
    %p140 = scmp.eq.s32.totalorder %s13, 1
    %p141 = scmp.ne.s32.totalorder %s136, %s138
    %p142 = scmp.eq.s32.totalorder %s13, 0
    %p143 = por %p141, %p142
    %p144 = scmp.ne.s32.totalorder %s136, %s138
    %p145 = scmp.eq.s32.totalorder %s18, 1
    %p146 = por %p144, %p145
    %p147 = scmp.ne.s32.totalorder %s138, %s139
    %p148 = scmp.eq.s32.totalorder %s18, 0
    %p149 = por %p147, %p148
    %p150 = scmp.ne.s32.totalorder %s138, %s139
    %p151 = scmp.eq.s32.totalorder %s19, 1
    %p152 = por %p150, %p151
    %p154 = scmp.ne.s32.totalorder %s139, %s153
    %p155 = scmp.eq.s32.totalorder %s19, 0
    %p156 = por %p154, %p155
    %s158 = sadd.s32 %s157, 1
    %p161 = scmp.eq.s32.totalorder %s13, 1
    %p162 = scmp.ne.s32.totalorder %s157, %s159
    %p163 = scmp.eq.s32.totalorder %s13, 0
    %p164 = por %p162, %p163
    %p165 = scmp.ne.s32.totalorder %s157, %s159
    %p166 = scmp.eq.s32.totalorder %s18, 1
    %p167 = por %p165, %p166
    %p168 = scmp.ne.s32.totalorder %s159, %s160
    %p169 = scmp.eq.s32.totalorder %s18, 0
    %p170 = por %p168, %p169
    %p171 = scmp.ne.s32.totalorder %s159, %s160
    %p172 = scmp.eq.s32.totalorder %s19, 1
    %p173 = por %p171, %p172
    %p175 = scmp.ne.s32.totalorder %s160, %s174
    %p176 = scmp.eq.s32.totalorder %s19, 0
    %p177 = por %p175, %p176
    %s178 = ssub.s32 %s13, %s20
    %p179 = scmp.eq.s32.totalorder %s178, 0
    %s181 = sadd.s32 %s180, 1
    %s182 = scalar_select %p179, %s180, %s181
    %p185 = pneg %p179
    %p186 = scmp.eq.s32.totalorder %s13, 1
    %p187 = por %p185, %p186
    %p188 = scmp.ne.s32.totalorder %s180, %s183
    %p189 = scmp.eq.s32.totalorder %s13, 0
    %p190 = por %p188, %p189
    %p191 = scmp.ne.s32.totalorder %s180, %s183
    %p192 = scmp.eq.s32.totalorder %s18, 1
    %p193 = por %p191, %p192
    %p194 = scmp.ne.s32.totalorder %s183, %s184
    %p195 = scmp.eq.s32.totalorder %s18, 0
    %p196 = por %p194, %p195
    %p197 = scmp.ne.s32.totalorder %s183, %s184
    %p198 = scmp.eq.s32.totalorder %s19, 1
    %p199 = por %p197, %p198
    %p201 = scmp.ne.s32.totalorder %s184, %s200
    %p202 = scmp.eq.s32.totalorder %s19, 0
    %p203 = por %p201, %p202
    %p204 = scmp.le.s32.totalorder 1, %s13
    %p205 = scmp.lt.s32.totalorder %s13, 3
    %p206 = pnand %p204, %p205
    %p207 = pneg %p206
    // Predicated region
    $region9: #{tpu_custom_call.1} parent=5 // pred_check
      _
    $region10: #{tpu_custom_call.1} parent=5 // pred_check_branch
      %209 = sbr.rel (%p206) target = $region12
    $region11: #{tpu_custom_call.1} parent=5 // pred_region
      %s210 = ssub.s32 %s13, 1
      // Predicated region
      $region13: #{tpu_custom_call.1} parent=11 // pred_check
        %p211 = pneg %p86
      $region14: #{tpu_custom_call.1} parent=11 // pred_check_branch
        %213 = sbr.rel (%p211) target = $region16
      $region15: #{tpu_custom_call.1} parent=11 // pred_region
        _
      $region16: #{tpu_custom_call.1} parent=11 // pred_fallthru
        _
      // Predicated region
      $region17: #{tpu_custom_call.1} parent=11 // pred_check
        %p214 = pneg %p107
      $region18: #{tpu_custom_call.1} parent=11 // pred_check_branch
        %216 = sbr.rel (%p214) target = $region20
      $region19: #{tpu_custom_call.1} parent=11 // pred_region
        _
      $region20: #{tpu_custom_call.1} parent=11 // pred_fallthru
        _
      // Predicated region
      $region21: #{tpu_custom_call.1} parent=11 // pred_check
        %p217 = pneg %p128
      $region22: #{tpu_custom_call.1} parent=11 // pred_check_branch
        %219 = sbr.rel (%p217) target = $region24
      $region23: #{tpu_custom_call.1} parent=11 // pred_region
        _
      $region24: #{tpu_custom_call.1} parent=11 // pred_fallthru
        _
      // Predicated region
      $region25: #{tpu_custom_call.1} parent=11 // pred_check
        %p220 = pneg %p149
      $region26: #{tpu_custom_call.1} parent=11 // pred_check_branch
        %222 = sbr.rel (%p220) target = $region28
      $region27: #{tpu_custom_call.1} parent=11 // pred_region
        _
      $region28: #{tpu_custom_call.1} parent=11 // pred_fallthru
        _
      // Predicated region
      $region29: #{tpu_custom_call.1} parent=11 // pred_check
        %p223 = pneg %p170
      $region30: #{tpu_custom_call.1} parent=11 // pred_check_branch
        %225 = sbr.rel (%p223) target = $region32
      $region31: #{tpu_custom_call.1} parent=11 // pred_region
        _
      $region32: #{tpu_custom_call.1} parent=11 // pred_fallthru
        _
    $region12: #{tpu_custom_call.1} parent=5 // pred_fallthru
      _
    %p226 = scmp.lt.s32.totalorder %s13, 2
    // Predicated region
    $region33: #{tpu_custom_call.1} parent=5 // pred_check
      %p227 = pneg %p226
    $region34: #{tpu_custom_call.1} parent=5 // pred_check_branch
      %229 = sbr.rel (%p227) target = $region36
    $region35: #{tpu_custom_call.1} parent=5 // pred_region
      // Predicated region
      $region37: #{tpu_custom_call.1} parent=35 // pred_check
        %p230 = pneg %p33
      $region38: #{tpu_custom_call.1} parent=35 // pred_check_branch
        %232 = sbr.rel (%p230) target = $region40
      $region39: #{tpu_custom_call.1} parent=35 // pred_region
        %p233 = scmp.lt.s32.totalorder %s13, 1
        %s234 = scalar_select %p233, %s13, 1
        %s235 = smul.addr %s234, 4
        %s236 = smul.addr %s235, 8
        %s237 = scalar_lea.vmem %s0, %s236
      $region40: #{tpu_custom_call.1} parent=35 // pred_fallthru
        _
      // Predicated region
      $region41: #{tpu_custom_call.1} parent=35 // pred_check
        %p238 = pneg %p59
      $region42: #{tpu_custom_call.1} parent=35 // pred_check_branch
        %240 = sbr.rel (%p238) target = $region44
      $region43: #{tpu_custom_call.1} parent=35 // pred_region
        %p241 = scmp.lt.s32.totalorder %s13, 1
        %s242 = scalar_select %p241, %s13, 1
        %s243 = smul.addr %s242, 4
        %s244 = smul.addr %s243, 8
        %s245 = scalar_lea.vmem %s1, %s244
      $region44: #{tpu_custom_call.1} parent=35 // pred_fallthru
        _
    $region36: #{tpu_custom_call.1} parent=5 // pred_fallthru
      _
    %p246 = scmp.le.s32.totalorder 1, %s13
    %p247 = scmp.lt.s32.totalorder %s13, 3
    %p248 = pnand %p246, %p247
    %p249 = pneg %p248
    // Predicated region
    $region45: #{tpu_custom_call.1} parent=5 // pred_check
      _
    $region46: #{tpu_custom_call.1} parent=5 // pred_check_branch
      %251 = sbr.rel (%p248) target = $region48
    $region47: #{tpu_custom_call.1} parent=5 // pred_region
      %s252 = ssub.s32 %s13, 1
      %p253 = scmp.lt.s32.totalorder %s18, 1
      %s254 = scalar_select %p253, %s18, 1
      %s255 = smul.addr %s254, 4
      %s256 = smul.addr %s255, 8
      %s257 = scalar_lea.vmem %s0, %s256
      %p258 = pneg %p39
      %p259 = pneg %p36
      %p260 = scmp.lt.s32.totalorder %s18, 1
      %s261 = scalar_select %p260, %s18, 1
      %s262 = smul.addr %s261, 4
      %s263 = smul.addr %s262, 8
      %s264 = scalar_lea.vmem %s1, %s263
      %p265 = pneg %p65
      %p266 = pneg %p62
      %p267 = pneg %p86
      %p268 = pneg %p83
      %p269 = pneg %p107
      %p270 = pneg %p104
      %p271 = pneg %p128
      %p272 = pneg %p125
      %p273 = pneg %p149
      %p274 = pneg %p146
      %p275 = pneg %p170
      %p276 = pneg %p167
      %p277 = pneg %p196
      %p278 = pneg %p193
      %p279 = scmp.lt.s32.totalorder %s18, 1
      %s280 = scalar_select %p279, %s18, 1
      %s281 = smul.addr %s280, 4
      %s282 = smul.addr %s281, 8
      %s283 = scalar_lea.vmem %s7, %s282
      %p284 = scmp.lt.s32.totalorder %s18, 1
      %s285 = scalar_select %p284, %s18, 1
      %s286 = smul.addr %s285, 4
      %s287 = smul.addr %s286, 8
      %s288 = scalar_lea.vmem %s0, %s287
      %p289 = scmp.lt.s32.totalorder %s18, 1
      %s290 = scalar_select %p289, %s18, 1
      %s291 = smul.addr %s290, 4
      %s292 = smul.addr %s291, 8
      %s293 = scalar_lea.vmem %s1, %s292
      %p294 = scmp.lt.s32.totalorder %s18, 1
      %s295 = scalar_select %p294, %s18, 1
      %s296 = smul.addr %s295, 4
      %s297 = smul.addr %s296, 8
      %s298 = scalar_lea.vmem %s7, %s297
      %v299 = vld [vmem:[%s288] sm:$0xff]
      %v300 = vld [vmem:[%s288 + $0x8] sm:$0xff]
      %v301 = vld [vmem:[%s288 + $0x10] sm:$0xf]
      %v302 = vld [vmem:[%s288 + $0x18] sm:$0xf]
      %v303 = vld [vmem:[%s293] sm:$0xff]
      %v304 = vld [vmem:[%s293 + $0x8] sm:$0xff]
      %v305 = vld [vmem:[%s293 + $0x10] sm:$0xf]
      %v306 = vld [vmem:[%s293 + $0x18] sm:$0xf]
      %v307 = vadd.f32 %v303, %v304
      %308 = vadd.xlane.f32.xlu0 %v307
      %v309 = vpop.xlane.xlu0 %308
      %vm310 = vcmask 1043456
      %v311 = vsel %vm310, %v305, 0.0
      %v312 = vsel %vm310, %v306, 0.0
      %v313 = vadd.f32 %v311, %v312
      %314 = vadd.xlane.f32.xlu0 %v313
      %v315 = vpop.xlane.xlu0 %314
      %v316 = vrcp.pop 256.0
      %v317 = vmul.f32 256.0, %v316
      %v318 = vsub.f32 1.0, %v317
      %v319 = vmul.f32 %v316, %v318
      %v320 = vadd.f32 %v316, %v319
      %vm321 = vweird.f32 %v316
      %v322 = vsel %vm321, %v316, %v320
      %v323 = vmul.f32 %v309, %v322
      %v324 = vmul.f32 %v315, %v322
      %v325 = vld [vmem:[%s5] sm:$0xff]
      %v326 = vld [vmem:[%s5 + $0x8] sm:$0xf]
      %v327 = vmul.f32 %v325, %v323
      %v328 = vmul.f32 %v326, %v324
      %vm329 = vcmask 15360
      %v330 = vsel %vm329, %v327, 0.0
      %vm331 = vcmask 11264
      %v332 = vsel %vm331, %v328, 0.0
      %v333 = vadd.f32 %v330, %v332
      %v334 = vrot.slane %v333, 4
      %v335 = vadd.f32 %v333, %v334
      %v336 = vrot.slane %v335, 2
      %v337 = vadd.f32 %v335, %v336
      %v338 = vrot.slane %v337, 1
      %v339 = vadd.f32 %v337, %v338
      %v340 = vmax.f32 %v339, 0.0
      %v341 = vld [vmem:[%s6] sm:$0xff]
      %v342 = vld [vmem:[%s6 + $0x8] sm:$0xf]
      %v343 = vmul.f32 %v341, %v340
      %v344 = vmul.f32 %v342, %v340
      %v345 = vsel %vm329, %v343, 0.0
      %346 = vadd.xlane.f32.xlu0 %v345
      %v347 = vpop.xlane.xlu0 %346
      %v348 = vsel %vm331, %v344, 0.0
      %349 = vadd.xlane.f32.xlu0 %v348
      %v350 = vpop.xlane.xlu0 %349
      %v351 = vld [vmem:[%s2] sm:$0xff]
      %v352 = vld [vmem:[%s2 + $0x8] sm:$0xf]
      %v353 = vld [vmem:[%s3] sm:$0xff]
      %v354 = vld [vmem:[%s3 + $0x8] sm:$0xf]
      %vm355 = vcmask 97280
      %v357 = vsel %vm355, %v353, 0
      %v360 = vsel %vm355, %v354, 0
      %v363 = vsel %vm310, %v305, 0
      %v366 = vsel %vm310, %v306, 0
      %368 = vmatpush.msra.mxu0 0.0
      %369 = vmatpush.msra.mxu0 0.0
      %370 = vmatpush.msra.mxu0 0.0
      %371 = vmatpush.msra.mxu0 0.0
      %372 = vmatpush.msra.mxu0 0.0
      %373 = vmatpush.msra.mxu0 0.0
      %374 = vmatpush.msra.mxu0 0.0
      %375 = vmatpush.msra.mxu0 0.0
      %376 = vmatpush.msra.mxu0 0.0
      %377 = vmatpush.msra.mxu0 0.0
      %378 = vmatpush.msra.mxu0 0.0
      %379 = vmatpush.msra.mxu0 0.0
      %380 = vmatpush.msra.mxu0 0.0
      %381 = vmatpush.msra.mxu0 0.0
      %382 = vmatpush.msra.mxu0 %v363
      %383 = vmatpush.msra.mxu0 %v303
      %384 = vmatmul.f32.gmra.mxu0 %v357
      %v385 = vpop.f32.mrf.mxu0
      %v386 = vadd.f32 0.0, %v385
      %387 = vmatmul.f32.gmra.mxu0 %v360
      %v388 = vpop.f32.mrf.mxu0
      %v389 = vadd.f32 0.0, %v388
      %390 = vdwg.mxu0
      %391 = vmatpush.msra.mxu0 0.0
      %392 = vmatpush.msra.mxu0 0.0
      %393 = vmatpush.msra.mxu0 0.0
      %394 = vmatpush.msra.mxu0 0.0
      %395 = vmatpush.msra.mxu0 0.0
      %396 = vmatpush.msra.mxu0 0.0
      %397 = vmatpush.msra.mxu0 0.0
      %398 = vmatpush.msra.mxu0 0.0
      %399 = vmatpush.msra.mxu0 0.0
      %400 = vmatpush.msra.mxu0 0.0
      %401 = vmatpush.msra.mxu0 0.0
      %402 = vmatpush.msra.mxu0 0.0
      %403 = vmatpush.msra.mxu0 0.0
      %404 = vmatpush.msra.mxu0 0.0
      %405 = vmatpush.msra.mxu0 %v366
      %406 = vmatpush.msra.mxu0 %v304
      %407 = vmatmul.f32.gmra.mxu0 %v357
      %v408 = vpop.f32.mrf.mxu0
      %v409 = vadd.f32 0.0, %v408
      %410 = vmatmul.f32.gmra.mxu0 %v360
      %v411 = vpop.f32.mrf.mxu0
      %v412 = vadd.f32 0.0, %v411
      %413 = vdwg.mxu0
      %v415 = vsel %vm355, %v351, 0
      %v418 = vsel %vm355, %v352, 0
      %v421 = vsel %vm310, %v301, 0
      %v424 = vsel %vm310, %v302, 0
      %426 = vmatpush.msra.mxu0 0.0
      %427 = vmatpush.msra.mxu0 0.0
      %428 = vmatpush.msra.mxu0 0.0
      %429 = vmatpush.msra.mxu0 0.0
      %430 = vmatpush.msra.mxu0 0.0
      %431 = vmatpush.msra.mxu0 0.0
      %432 = vmatpush.msra.mxu0 0.0
      %433 = vmatpush.msra.mxu0 0.0
      %434 = vmatpush.msra.mxu0 0.0
      %435 = vmatpush.msra.mxu0 0.0
      %436 = vmatpush.msra.mxu0 0.0
      %437 = vmatpush.msra.mxu0 0.0
      %438 = vmatpush.msra.mxu0 0.0
      %439 = vmatpush.msra.mxu0 0.0
      %440 = vmatpush.msra.mxu0 %v421
      %441 = vmatpush.msra.mxu0 %v299
      %442 = vmatmul.f32.gmra.mxu0 %v415
      %v443 = vpop.f32.mrf.mxu0
      %v444 = vadd.f32 %v386, %v443
      %445 = vmatmul.f32.gmra.mxu0 %v418
      %v446 = vpop.f32.mrf.mxu0
      %v447 = vadd.f32 %v389, %v446
      %448 = vdwg.mxu0
      %449 = vmatpush.msra.mxu0 0.0
      %450 = vmatpush.msra.mxu0 0.0
      %451 = vmatpush.msra.mxu0 0.0
      %452 = vmatpush.msra.mxu0 0.0
      %453 = vmatpush.msra.mxu0 0.0
      %454 = vmatpush.msra.mxu0 0.0
      %455 = vmatpush.msra.mxu0 0.0
      %456 = vmatpush.msra.mxu0 0.0
      %457 = vmatpush.msra.mxu0 0.0
      %458 = vmatpush.msra.mxu0 0.0
      %459 = vmatpush.msra.mxu0 0.0
      %460 = vmatpush.msra.mxu0 0.0
      %461 = vmatpush.msra.mxu0 0.0
      %462 = vmatpush.msra.mxu0 0.0
      %463 = vmatpush.msra.mxu0 %v424
      %464 = vmatpush.msra.mxu0 %v300
      %465 = vmatmul.f32.gmra.mxu0 %v415
      %v466 = vpop.f32.mrf.mxu0
      %v467 = vadd.f32 %v409, %v466
      %468 = vmatmul.f32.gmra.mxu0 %v418
      %v469 = vpop.f32.mrf.mxu0
      %v470 = vadd.f32 %v412, %v469
      %471 = vdwg.mxu0
      %v472 = vld [vmem:[%s4] sm:$0xff]
      %v473 = vld [vmem:[%s4 + $0x8] sm:$0xf]
      %475 = vset.pattern.permute.xlu0 0
      %476 = vperm.xlu0 %475, %v472
      %v477 = vpop.permute.xlu0 %476
      %480 = vset.pattern.permute.xlu0 0
      %481 = vperm.xlu0 %480, %v473
      %v482 = vpop.permute.xlu0 %481
      %v484 = vadd.f32 %v444, %v477
      %v485 = vadd.f32 %v467, %v477
      %v486 = vadd.f32 %v447, %v482
      %v487 = vadd.f32 %v470, %v482
      %v488 = vmul.f32 %v484, %v347
      %v489 = vmul.f32 %v485, %v347
      %v490 = vmul.f32 %v486, %v350
      %v491 = vmul.f32 %v487, %v350
      %v492 = vadd.f32 %v488, 1.0
      %v493 = vadd.f32 %v489, 1.0
      %v494 = vadd.f32 %v490, 1.0
      %v495 = vadd.f32 %v491, 1.0
      %v496 = vmul.f32 %v299, %v492
      %v497 = vmul.f32 %v300, %v493
      %v498 = vmul.f32 %v301, %v494
      %v499 = vmul.f32 %v302, %v495
      %500 = vst [vmem:[%s298] sm:$0xff] %v496
      %501 = vst [vmem:[%s298 + $0x8] sm:$0xff] %v497
      %502 = vst [vmem:[%s298 + $0x10] sm:$0xf] %v498
      %503 = vst [vmem:[%s298 + $0x18] sm:$0xf] %v499
      %p504 = scmp.lt.s32.totalorder %s18, 1
      %s505 = scalar_select %p504, %s18, 1
      %s506 = smul.addr %s505, 4
      %s507 = smul.addr %s506, 8
      %s508 = scalar_lea.vmem %s7, %s507
      // Predicated region
      $region49: #{tpu_custom_call.1} parent=47 // pred_check
        %p509 = pneg %p193
      $region50: #{tpu_custom_call.1} parent=47 // pred_check_branch
        %511 = sbr.rel (%p509) target = $region52
      $region51: #{tpu_custom_call.1} parent=47 // pred_region
        _
      $region52: #{tpu_custom_call.1} parent=47 // pred_fallthru
        _
    $region48: #{tpu_custom_call.1} parent=5 // pred_fallthru
      _
    %p512 = scmp.le.s32.totalorder 2, %s13
    // Predicated region
    $region53: #{tpu_custom_call.1} parent=5 // pred_check
      %p513 = pneg %p512
    $region54: #{tpu_custom_call.1} parent=5 // pred_check_branch
      %515 = sbr.rel (%p513) target = $region56
    $region55: #{tpu_custom_call.1} parent=5 // pred_region
      %s516 = ssub.s32 %s13, 2
      // Predicated region
      $region57: #{tpu_custom_call.1} parent=55 // pred_check
        %p517 = pneg %p199
      $region58: #{tpu_custom_call.1} parent=55 // pred_check_branch
        %519 = sbr.rel (%p517) target = $region60
      $region59: #{tpu_custom_call.1} parent=55 // pred_region
        %p520 = scmp.lt.s32.totalorder %s19, 1
        %s521 = scalar_select %p520, %s19, 1
        %s522 = smul.addr %s521, 4
        %s523 = smul.addr %s522, 8
        %s524 = scalar_lea.vmem %s7, %s523
      $region60: #{tpu_custom_call.1} parent=55 // pred_fallthru
        _
    $region56: #{tpu_custom_call.1} parent=5 // pred_fallthru
      _
  $region6: #{tpu_custom_call.1} parent=0 // loop_footer
    %s17 = sadd.s32 1, %s13
  $region7: #{tpu_custom_call.1} parent=0 // loop_footer_branch
    %12 = sbr.rel target = $region3
  $region8: #{tpu_custom_call.1} parent=0 // loop_exit
    _

</llo_original>
